<compile_context>
chip_gen: v6e
topology: v6e:2x2x1
jax: 0.10.0
libtpu: 0.0.40
codegen_flags: <defaults>
</compile_context>

<pallas_src>
import jax
import jax.numpy as jnp
from jax.experimental import pallas as pl
from jax.experimental.pallas import tpu as pltpu


# ---------------------------------------------------------------------------
# Brute.forward(x) == x
# ---------------------------------------------------------------------------
def brute_forward(x):
    """Exact forward pass of Brute: identity. No kernel, no HBM traffic."""
    return x


def _copy_kernel(x_ref, o_ref):
    o_ref[...] = x_ref[...]


def brute_forward_copy(x, *, max_lanes=1024, max_rows=512):
    """Optional materialized identity: tiled, lane-dense, megacore-parallel
    copy with input/output aliasing. Falls back to passthrough if the flat
    size is not a multiple of 128 (identity is exact either way)."""
    n = int(x.size)
    lanes = 0
    for cand in (4096, 2048, 1024, 512, 256, 128):
        if cand <= max_lanes and n % cand == 0:
            lanes = cand
            break
    if lanes == 0:
        return x  # odd size: passthrough is exact and free
    rows = n // lanes
    if rows <= max_rows:
        br = rows                         # full extent: any row count allowed
    else:
        br = max(8, (max_rows // 8) * 8)  # keep (8,128)-aligned partial blocks
    x2 = x.reshape(rows, lanes)
    out = pl.pallas_call(
        _copy_kernel,
        out_shape=jax.ShapeDtypeStruct((rows, lanes), x.dtype),
        grid_spec=pltpu.PrefetchScalarGridSpec(
            num_scalar_prefetch=0,
            grid=(pl.cdiv(rows, br),),
            in_specs=[pl.BlockSpec((br, lanes), lambda i: (i, 0))],
            out_specs=pl.BlockSpec((br, lanes), lambda i: (i, 0)),
        ),
        compiler_params=pltpu.CompilerParams(
            dimension_semantics=("parallel",),  # shard across TCs (v7x megacore)
        ),
        input_output_aliases={0: 0},  # reuse the input buffer; no new allocation
    )(x2)
    return out.reshape(x.shape)


# ---------------------------------------------------------------------------
# MRF hot path (Brute.infer / Brute.update numerator-denominator reduction)
# ---------------------------------------------------------------------------
def _infer_kernel(feat_ref, w_ref, mask_ref, out_ref, m_ref, acc_ref):
    # feat_ref: (F, TU), w_ref: (F, 1) f32, mask_ref: (2, TU)  [tar; cond]
    # out_ref: (1, 1) f32, scratch: m_ref (1,1) running max, acc_ref (2,1) sums
    k = pl.program_id(0)

    @pl.when(k == 0)
    def _():
        m_ref[...] = jnp.full_like(m_ref, -jnp.inf)
        acc_ref[...] = jnp.zeros_like(acc_ref)

    feat = feat_ref[...].astype(jnp.float32)          # (F, TU)  upcast in-kernel
    masks = mask_ref[...].astype(jnp.float32)         # (2, TU)
    w = w_ref[...]                                    # (F, 1)   f32, resident

    # Weighted F-reduction on the VPU (F is tiny; MXU would be <7% utilized).
    logits = jnp.sum(feat * w, axis=0, keepdims=True)               # (1, TU)

    # Online max-subtraction: the tar/cond ratio is invariant to it, and it
    # keeps exp() from overflowing across grid steps.
    m_prev = m_ref[...]                                             # (1, 1)
    m_new = jnp.maximum(m_prev, jnp.max(logits, axis=1, keepdims=True))
    scale = jnp.exp(m_prev - m_new)                                 # (1, 1)
    p = jnp.exp(logits - m_new)                                     # (1, TU) EUP

    # Fused masked reductions: one multiply + one lane reduce -> [tar, cond].
    partial = jnp.sum(masks * p, axis=1, keepdims=True)             # (2, 1)
    acc_ref[...] = acc_ref[...] * scale + partial
    m_ref[...] = m_new

    @pl.when(k == pl.num_programs(0) - 1)
    def _():
        acc = acc_ref[...]                                          # (2, 1)
        # Same divide-by-zero policy as the PyTorch reference (inf/nan).
        # Scalar stays as a (1,1) VMEM block: a single 4-byte store at the
        # end of the grid; kept off SMEM for robust lowering of the
        # vector-computed value.
        out_ref[...] = acc[0:1, :] / acc[1:2, :]


def brute_infer(features_firing, weights, target_mask, condition_mask, *, tu=8192):
    """Pallas implementation of Brute.infer: P(target | condition).

    features_firing: (U, F)  0/1 feature firings (f32 or bf16 storage)
    weights:         (F,)
    target_mask:     (U,)    0/1
    condition_mask:  (U,)    0/1
    """
    U, F = features_firing.shape

    # Lane-dense layouts: long U axis on the 128-lane axis (layout plumbing,
    # done once outside the kernel).
    feat_t = features_firing.T                                   # (F, U)
    masks = jnp.stack([target_mask, condition_mask], axis=0)     # (2, U)
    w_col = weights.reshape(F, 1).astype(jnp.float32)            # (F, 1)

    # Tile size over U: multiple of 128, clamped; (F, tu) f32 blocks stay far
    # below VMEM budgets (v7x 64 MiB, v5e scoped 16 MiB) even double-buffered.
    tu = max(128, (min(int(tu), 1 << 15) // 128) * 128)
    u_min = ((U + 127) // 128) * 128
    tu = min(tu, u_min)
    u_pad = ((U + tu - 1) // tu) * tu
    if u_pad != U:
        # Zero padding is exact: padded columns have zero masks, so they add
        # nothing to either sum; only the (cancelling) shared max can change.
        feat_t = jnp.pad(feat_t, ((0, 0), (0, u_pad - U)))
        masks = jnp.pad(masks, ((0, 0), (0, u_pad - U)))

    out = pl.pallas_call(
        _infer_kernel,
        out_shape=jax.ShapeDtypeStruct((1, 1), jnp.float32),
        grid_spec=pltpu.PrefetchScalarGridSpec(
            num_scalar_prefetch=0,
            grid=(u_pad // tu,),
            in_specs=[
                pl.BlockSpec((F, tu), lambda k: (0, k)),   # features, streamed
                pl.BlockSpec((F, 1), lambda k: (0, 0)),    # weights, resident
                pl.BlockSpec((2, tu), lambda k: (0, k)),   # stacked masks
            ],
            out_specs=pl.BlockSpec((1, 1), lambda k: (0, 0)),
            scratch_shapes=[
                pltpu.VMEM((1, 1), jnp.float32),   # running max
                pltpu.VMEM((2, 1), jnp.float32),   # [tar_sum, cond_sum]
            ],
        ),
        compiler_params=pltpu.CompilerParams(
            dimension_semantics=("arbitrary",),    # U is a carried reduction
        ),
    )(feat_t, w_col, masks)
    return out[0, 0]


# ---------------------------------------------------------------------------
# Pure-JAX reference for correctness checking
# ---------------------------------------------------------------------------
def _infer_ref(features_firing, weights, target_mask, condition_mask):
    firing = jnp.exp(jnp.sum(features_firing * weights, axis=-1))
    return jnp.sum(target_mask * firing) / jnp.sum(condition_mask * firing)


if __name__ == "__main__":
    key = jax.random.PRNGKey(0)
    k1, k2, k3 = jax.random.split(key, 3)

    # --- forward(x) identity (NCHW input, module semantics) ----------------
    x = jax.random.normal(k1, (2, 4, 16, 16), dtype=jnp.float32)
    y = brute_forward(x)                                   # zero-cost passthrough
    assert y.shape == x.shape and y.dtype == x.dtype
    assert bool(jnp.allclose(y, x)), "forward identity mismatch"
    y2 = jax.block_until_ready(brute_forward_copy(x))      # tiled Pallas copy path
    assert bool(jnp.allclose(y2, x)), "forward copy mismatch"

    # --- MRF hot path -------------------------------------------------------
    # Synthetic universe: 4 variables, total_pos = [4, 4, 4, 4] -> U = 256;
    # F = 8 boolean feature-firing columns.
    U, F = 256, 8
    features_firing = jax.random.bernoulli(k2, p=0.5, shape=(U, F)).astype(jnp.float32)
    weights = jax.random.normal(k3, (F,), dtype=jnp.float32)   # nn.Parameter(randn)
    checker = jnp.arange(U)
    condition_mask = (checker % 4 == 1).astype(jnp.float32)
    target_mask = condition_mask * ((checker // 4) % 4 == 2).astype(jnp.float32)

    want = _infer_ref(features_firing, weights, target_mask, condition_mask)

    # f32 storage, tu=128 -> 2 grid steps: exercises the online-max rescaling
    # and cross-step accumulation path.
    got = jax.block_until_ready(
        brute_infer(features_firing, weights, target_mask, condition_mask, tu=128)
    )
    assert bool(jnp.allclose(got, want, rtol=1e-5, atol=1e-6)), (got, want)

    # bf16 storage (exact for 0/1 data; halves HBM traffic for large U),
    # default tile -> single grid step.
    got_bf16 = jax.block_until_ready(
        brute_infer(
            features_firing.astype(jnp.bfloat16),
            weights,
            target_mask.astype(jnp.bfloat16),
            condition_mask.astype(jnp.bfloat16),
        )
    )
    assert bool(jnp.allclose(got_bf16, want, rtol=1e-5, atol=1e-6)), (got_bf16, want)

    # TODO(synk): json parsing / constraint building / dict bookkeeping
    # (from_json, translate, finish_build) and the SGD training loop are
    # host-side Python with no Pallas equivalent; only the firing/reduction
    # numeric path is kernelized.
    print("KERNEL_OK")
</pallas_src>

<mosaic_0001>
module attributes {stable_mosaic.version = 11 : i64} {
  func.func @_copy_kernel(%arg0: i32, %arg1: memref<2x1024xf32, #tpu.memory_space<vmem>>, %arg2: memref<2x1024xf32, #tpu.memory_space<vmem>>) attributes {dimension_semantics = [#tpu.dimension_semantics<parallel>], iteration_bounds = array<i64: 1>, scalar_prefetch = 0 : i64, scratch_operands = 0 : i64, tpu.core_type = #tpu.core_type<tc>, window_params = [{transform_indices = @transform_0, window_bounds = array<i64: 2, 1024>}, {transform_indices = @transform_1, window_bounds = array<i64: 2, 1024>}]} {
    %c0 = arith.constant 0 : index
    %c0_0 = arith.constant 0 : index
    %0 = vector.load %arg1[%c0, %c0_0] : memref<2x1024xf32, #tpu.memory_space<vmem>>, vector<2x1024xf32>
    %c0_1 = arith.constant 0 : index
    %c0_2 = arith.constant 0 : index
    %1 = vector.load %arg2[%c0_1, %c0_2] : memref<2x1024xf32, #tpu.memory_space<vmem>>, vector<2x1024xf32>
    tpu.vector_store %arg2[%c0_1, %c0_2], %0 {strides = array<i32>} : memref<2x1024xf32, #tpu.memory_space<vmem>>, vector<2x1024xf32>,
    return
  }
  func.func @transform_0(%arg0: i32) -> (i32, i32) {
    %c0_i32 = arith.constant 0 : i32
    %c0_i32_0 = arith.constant 0 : i32
    return %arg0, %c0_i32 : i32, i32
  }
  func.func @transform_1(%arg0: i32) -> (i32, i32) {
    %c0_i32 = arith.constant 0 : i32
    %c0_i32_0 = arith.constant 0 : i32
    return %arg0, %c0_i32 : i32, i32
  }
}

</mosaic_0001>

<llo_original>
// kernel: tpu_custom_call.1
$region0: #{tpu_custom_call.1}
  #allocation0 [shape = 'u32[]', space=smem, size = 0x4, offset = 0x4, fixed_abs, tag = 'smem constant byte address 0x4 - core index']
  #allocation1 [shape = 'u32[144,128]{1,0:T(1,128)}', space=vmem, size = 0x12000, scoped, tag = 'internal scratch']
  %s0 = inlined_call_operand.hbm [shape: f32[2,1024], index: 0, kind: input, shape index: {}, may-alias: {0,1}]
  %s1 = inlined_call_operand.hbm [shape: f32[2,1024], index: 1, kind: output, shape index: {}, may-alias: {0,1}]
  %s2 = sld [smem:[#allocation0]]
  $region18: #{tpu_custom_call.1} parent=0
    _
  %s4 = ssub.s32 1, %s2
  %s5 = scalar_select 0, %s4, %s2
  $region1: #{tpu_custom_call.1} parent=0
    #allocation2 [shape = 'u8[8192]{0}', space=vmem, size = 0x2000, scoped, tag = 'input window, operand 0, single buffered']
    #allocation3 [shape = 's32[1]{0}', space=sflag, size = 0x4, scoped, tag = 'scoped memory for tpu_custom_call.1']
    #allocation4 [shape = 's32[1]{0}', space=sflag, size = 0x4, scoped, tag = 'scoped memory for tpu_custom_call.1']
    #allocation5 [shape = 'u8[8192]{0}', space=vmem, size = 0x2000, scoped, tag = 'output window, operand 0, single buffered']
    %6 = vsyncpa [#allocation3], 0
    %7 = vsyncpa [#allocation4], 0
    // Predicated region
    $region2: #{tpu_custom_call.1} parent=1 // pred_check
      _
    $region3: #{tpu_custom_call.1} parent=1 // pred_check_branch
      %9 = sbr.rel (0) target = $region5
    $region4: #{tpu_custom_call.1} parent=1 // pred_region
      %s11 = ssub.s32 256, 256
      %12 = vsyncadd [#allocation3], %s11
      %s14 = sshll.u32 [#allocation2], 4
      %s15 = int_to_ptr.vmem [resolvable:$true] %s14
      %17 = dma.hbm_to_vmem [thread:$0]  %s0, 256, %s15, [#allocation3]
    $region5: #{tpu_custom_call.1} parent=1 // pred_fallthru
      _
    // Predicated region
    $region6: #{tpu_custom_call.1} parent=1 // pred_check
      _
    $region7: #{tpu_custom_call.1} parent=1 // pred_check_branch
      %19 = sbr.rel (0) target = $region9
    $region8: #{tpu_custom_call.1} parent=1 // pred_region
      %20 = dma.done [#allocation3], 256
    $region9: #{tpu_custom_call.1} parent=1 // pred_fallthru
      _
    %v21 = vld [vmem:[#allocation2] sm:$0xff]
    %v22 = vld [vmem:[#allocation2 + $0x8] sm:$0xff]
    %23 = vst [vmem:[#allocation5] sm:$0xff] %v21
    %24 = vst [vmem:[#allocation5 + $0x8] sm:$0xff] %v22
    // Predicated region
    $region10: #{tpu_custom_call.1} parent=1 // pred_check
      _
    $region11: #{tpu_custom_call.1} parent=1 // pred_check_branch
      %26 = sbr.rel (0) target = $region13
    $region12: #{tpu_custom_call.1} parent=1 // pred_region
      %s28 = ssub.s32 256, 256
      %29 = vsyncadd [#allocation4], %s28
      %s31 = sshll.u32 [#allocation5], 4
      %s32 = int_to_ptr.vmem [resolvable:$true] %s31
      %34 = dma.vmem_to_hbm [thread:$0]  %s32, 256, %s1, [#allocation4]
    $region13: #{tpu_custom_call.1} parent=1 // pred_fallthru
      _
    // Predicated region
    $region14: #{tpu_custom_call.1} parent=1 // pred_check
      _
    $region15: #{tpu_custom_call.1} parent=1 // pred_check_branch
      %36 = sbr.rel (0) target = $region17
    $region16: #{tpu_custom_call.1} parent=1 // pred_region
      %37 = dma.done [#allocation4], 256
    $region17: #{tpu_custom_call.1} parent=1 // pred_fallthru
      _
    %38 = vsyncpa [#allocation3], 1
    %39 = vsyncpa [#allocation4], 1

</llo_original>
